<compile_context>
chip_gen: v5e
topology: v5e:2x2
jax: 0.10.0
libtpu: 0.0.40
codegen_flags: <defaults>
</compile_context>

<pallas_src>
import math

import jax
import jax.numpy as jnp
from jax.experimental import pallas as pl
from jax.experimental.pallas import tpu as pltpu

# Small shapes consistent with the module: batch=2, seq=8 -> N=16 rows of
# log-probabilities over a vocab of size V=32.
N = 16            # number of (batch*seq) positions
V = 32            # vocab size ("size" in the module); x.shape[1] == V
PADDING_IDX = 0
SMOOTHING = 0.4
CONFIDENCE = 1.0 - SMOOTHING

LANES = 128
assert (N * V) % LANES == 0 and LANES % V == 0 and (V & (V - 1)) == 0
NROWS = (N * V) // LANES                     # 4 lane-dense rows

BASE = SMOOTHING / (V - 2)                   # smoothing mass per class
BASE_LOG_BASE = BASE * math.log(BASE)        # td*log(td) for the smoothed slots
CONF_LOG_CONF = CONFIDENCE * math.log(CONFIDENCE)  # td*log(td) for target slot


def _build_td_and_terms(x_ref, tgt_ref):
    """Shared body: lane-dense true_dist + per-element KL terms (no log)."""
    x = x_ref[...]                                   # (NROWS, 128) f32 log-probs
    tgt = tgt_ref[...]                               # (NROWS, 128) int32, target[row]
    # Column index within the original (N, V) layout depends only on the lane
    # because V divides 128.
    col = jax.lax.broadcasted_iota(jnp.int32, (NROWS, LANES), 1) & (V - 1)

    is_tgt = col == tgt                              # scatter position
    zero = (col == PADDING_IDX) | (tgt == PADDING_IDX)   # pad column / pad row

    td = jnp.where(is_tgt, jnp.float32(CONFIDENCE), jnp.float32(BASE))
    td = jnp.where(zero, jnp.float32(0.0), td)

    # td * log(td) selected from compile-time constants (0*log(0) := 0).
    c = jnp.where(is_tgt, jnp.float32(CONF_LOG_CONF), jnp.float32(BASE_LOG_BASE))
    c = jnp.where(zero, jnp.float32(0.0), c)

    terms = c - td * x                               # td*(log(td) - x)
    return td, terms


def _kernel_loss_only(x_ref, tgt_ref, loss_ref):
    _, terms = _build_td_and_terms(x_ref, tgt_ref)
    loss_ref[0, 0] = jnp.sum(terms)


def _kernel_with_td(x_ref, tgt_ref, loss_ref, td_ref):
    td, terms = _build_td_and_terms(x_ref, tgt_ref)
    td_ref[...] = td
    loss_ref[0, 0] = jnp.sum(terms)


def label_smoothing(x, target, return_true_dist=False):
    """LabelSmoothing.forward. Returns loss, or (loss, true_dist) if asked."""
    x_flat = x.reshape(NROWS, LANES)
    tgt_flat = jnp.broadcast_to(
        target.astype(jnp.int32)[:, None], (N, V)).reshape(NROWS, LANES)

    vmem = pl.BlockSpec(memory_space=pltpu.MemorySpace.VMEM)
    smem = pl.BlockSpec(memory_space=pltpu.MemorySpace.SMEM)

    if return_true_dist:
        loss, td_flat = pl.pallas_call(
            _kernel_with_td,
            out_shape=(
                jax.ShapeDtypeStruct((1, 1), jnp.float32),        # scalar loss
                jax.ShapeDtypeStruct((NROWS, LANES), jnp.float32),  # true_dist
            ),
            in_specs=[vmem, vmem],
            out_specs=(smem, vmem),
        )(x_flat, tgt_flat)
        return loss[0, 0], td_flat.reshape(N, V)

    loss = pl.pallas_call(
        _kernel_loss_only,
        out_shape=jax.ShapeDtypeStruct((1, 1), jnp.float32),
        in_specs=[vmem, vmem],
        out_specs=smem,
    )(x_flat, tgt_flat)
    return loss[0, 0]


def reference(x, target):
    """Pure-JAX reference mirroring the PyTorch forward exactly."""
    td = jnp.full((N, V), SMOOTHING / (V - 2), jnp.float32)
    td = td.at[jnp.arange(N), target].set(CONFIDENCE)            # scatter_
    td = td.at[:, PADDING_IDX].set(0.0)                          # pad column
    td = jnp.where((target == PADDING_IDX)[:, None], 0.0, td)    # index_fill_ rows
    terms = jnp.where(td > 0.0, td * (jnp.log(jnp.where(td > 0.0, td, 1.0)) - x), 0.0)
    return jnp.sum(terms), td                                    # KLDivLoss(sum)


if __name__ == "__main__":
    key = jax.random.PRNGKey(0)
    k_logits, k_tgt = jax.random.split(key)

    # x is the model output after log_softmax (what KLDivLoss expects).
    logits = jax.random.normal(k_logits, (N, V), jnp.float32)
    x = jax.nn.log_softmax(logits, axis=-1)

    target = jax.random.randint(k_tgt, (N,), 0, V, jnp.int32)
    # Force a couple of padding positions to exercise the row-zeroing path.
    target = target.at[3].set(PADDING_IDX).at[7].set(PADDING_IDX)

    fn = jax.jit(label_smoothing, static_argnames="return_true_dist")

    loss, true_dist = jax.block_until_ready(fn(x, target, return_true_dist=True))
    loss_only = jax.block_until_ready(fn(x, target, return_true_dist=False))

    ref_loss, ref_td = reference(x, target)
    assert loss.shape == () and loss_only.shape == ()
    assert true_dist.shape == (N, V)
    td_err = float(jnp.max(jnp.abs(true_dist - ref_td)))
    loss_err = float(jnp.abs(loss - ref_loss))
    assert jnp.allclose(true_dist, ref_td, rtol=1e-5, atol=1e-5), f"td err={td_err}"
    assert jnp.allclose(loss, ref_loss, rtol=1e-4, atol=1e-4), f"loss err={loss_err}"
    assert jnp.allclose(loss_only, ref_loss, rtol=1e-4, atol=1e-4)
    print("KERNEL_OK")
</pallas_src>

<mosaic_0001>
module attributes {stable_mosaic.version = 11 : i64} {
  func.func @_kernel_with_td(%arg0: memref<4x128xf32, #tpu.memory_space<vmem>>, %arg1: memref<4x128xi32, #tpu.memory_space<vmem>>, %arg2: memref<1x1xf32, #tpu.memory_space<smem>>, %arg3: memref<4x128xf32, #tpu.memory_space<vmem>>) attributes {dimension_semantics = [], scalar_prefetch = 0 : i64, scratch_operands = 0 : i64, tpu.core_type = #tpu.core_type<tc>} {
    %c0 = arith.constant 0 : index
    %c0_0 = arith.constant 0 : index
    %0 = vector.load %arg0[%c0, %c0_0] : memref<4x128xf32, #tpu.memory_space<vmem>>, vector<4x128xf32>
    %c0_1 = arith.constant 0 : index
    %c0_2 = arith.constant 0 : index
    %1 = vector.load %arg1[%c0_1, %c0_2] : memref<4x128xi32, #tpu.memory_space<vmem>>, vector<4x128xi32>
    %2 = tpu.iota {dimensions = array<i32: 1>} : vector<4x128xi32>
    %c31_i32 = arith.constant 31 : i32
    %3 = vector.broadcast %c31_i32 : i32 to vector<4x128xi32>
    %4 = arith.andi %2, %3 : vector<4x128xi32>
    %5 = arith.cmpi eq, %4, %1 : vector<4x128xi32>
    %c0_i32 = arith.constant 0 : i32
    %6 = vector.broadcast %c0_i32 : i32 to vector<4x128xi32>
    %7 = arith.cmpi eq, %4, %6 : vector<4x128xi32>
    %c0_i32_3 = arith.constant 0 : i32
    %8 = vector.broadcast %c0_i32_3 : i32 to vector<4x128xi32>
    %9 = arith.cmpi eq, %1, %8 : vector<4x128xi32>
    %10 = arith.ori %7, %9 : vector<4x128xi1>
    %cst = arith.constant 6.000000e-01 : f32
    %cst_4 = arith.constant 0.0133333337 : f32
    %11 = vector.broadcast %cst : f32 to vector<4x128xf32>
    %12 = vector.broadcast %cst_4 : f32 to vector<4x128xf32>
    %13 = arith.select %5, %11, %12 : vector<4x128xi1>, vector<4x128xf32>
    %cst_5 = arith.constant 0.000000e+00 : f32
    %14 = vector.broadcast %cst_5 : f32 to vector<4x128xf32>
    %15 = arith.select %10, %14, %13 : vector<4x128xi1>, vector<4x128xf32>
    %cst_6 = arith.constant -0.306495368 : f32
    %cst_7 = arith.constant -0.0575665087 : f32
    %16 = vector.broadcast %cst_6 : f32 to vector<4x128xf32>
    %17 = vector.broadcast %cst_7 : f32 to vector<4x128xf32>
    %18 = arith.select %5, %16, %17 : vector<4x128xi1>, vector<4x128xf32>
    %cst_8 = arith.constant 0.000000e+00 : f32
    %19 = vector.broadcast %cst_8 : f32 to vector<4x128xf32>
    %20 = arith.select %10, %19, %18 : vector<4x128xi1>, vector<4x128xf32>
    %21 = arith.mulf %15, %0 : vector<4x128xf32>
    %22 = arith.subf %20, %21 : vector<4x128xf32>
    %c0_9 = arith.constant 0 : index
    %c0_10 = arith.constant 0 : index
    %23 = vector.load %arg3[%c0_9, %c0_10] : memref<4x128xf32, #tpu.memory_space<vmem>>, vector<4x128xf32>
    tpu.vector_store %arg3[%c0_9, %c0_10], %15 {strides = array<i32>} : memref<4x128xf32, #tpu.memory_space<vmem>>, vector<4x128xf32>,
    %24 = vector.shape_cast %22 : vector<4x128xf32> to vector<1x4x128xf32>
    %cst_11 = arith.constant dense<0.000000e+00> : vector<1xf32>
    %25 = vector.multi_reduction <add>, %24, %cst_11 [1, 2] : vector<1x4x128xf32> to vector<1xf32>
    %26 = vector.shape_cast %25 : vector<1xf32> to vector<1x1x1xf32>
    %27 = vector.extract %26[0, 0, 0] : f32 from vector<1x1x1xf32>
    %c0_12 = arith.constant 0 : index
    %c0_13 = arith.constant 0 : index
    %28 = memref.load %arg2[%c0_12, %c0_13] : memref<1x1xf32, #tpu.memory_space<smem>>
    memref.store %27, %arg2[%c0_12, %c0_13] : memref<1x1xf32, #tpu.memory_space<smem>>
    return
  }
}

</mosaic_0001>

<llo_original>
// kernel: label_smoothing.1
$region0: #{label_smoothing.1}
  #allocation0 [shape = 'u32[]', space=smem, size = 0x4, offset = 0x4, fixed_abs, tag = 'smem constant byte address 0x4 - core index']
  #allocation1 [shape = 'u32[72,128]{1,0:T(1,128)}', space=vmem, size = 0x9000, scoped, tag = 'internal scratch']
  %s0 = inlined_call_operand.vmem [shape: f32[4,128], index: 0, kind: input, shape index: {}]
  %s1 = inlined_call_operand.vmem [shape: s32[4,128], index: 1, kind: input, shape index: {}]
  %s2 = inlined_call_operand.hbm [shape: f32[1,1], index: 2, kind: output, shape index: {0}]
  %s3 = inlined_call_operand.vmem [shape: f32[4,128], index: 3, kind: output, shape index: {1}]
  %4 = xla_tuple %s2, %s3
  %s5 = sld [smem:[#allocation0]]
  $region26: #{label_smoothing.1} parent=0
    _
  %s7 = ssub.s32 1, %s5
  %s8 = scalar_select 0, %s7, %s5
  $region1: #{label_smoothing.1} parent=0
    #allocation2 [shape = 'u8[512]{0}', space=smem, size = 0x200, scoped, tag = 'output window, operand 0, single buffered']
    #allocation3 [shape = 's32[1]{0}', space=sflag, size = 0x4, scoped, tag = 'scoped memory for label_smoothing.1']
    %9 = vsyncpa [#allocation3], 0
    // Predicated region
    $region2: #{label_smoothing.1} parent=1 // pred_check
      _
    $region3: #{label_smoothing.1} parent=1 // pred_check_branch
      %11 = sbr.rel (0) target = $region5
    $region4: #{label_smoothing.1} parent=1 // pred_region
      _
    $region5: #{label_smoothing.1} parent=1 // pred_fallthru
      _
    // Predicated region
    $region6: #{label_smoothing.1} parent=1 // pred_check
      _
    $region7: #{label_smoothing.1} parent=1 // pred_check_branch
      %13 = sbr.rel (0) target = $region9
    $region8: #{label_smoothing.1} parent=1 // pred_region
      _
    $region9: #{label_smoothing.1} parent=1 // pred_fallthru
      _
    %v14 = vld [vmem:[%s0] sm:$0xf]
    %v15 = vld [vmem:[%s1] sm:$0xf]
    %v16 = vlaneseq
    %v17 = vand.u32 %v16, 127
    %v18 = vand.u32 %v17, 31
    %vm19 = vcmp.eq.s32.totalorder %v18, %v15
    %vm20 = vcmp.eq.s32.totalorder %v18, 0
    %vm21 = vcmp.eq.s32.totalorder %v15, 0
    %vm22 = vmor %vm20, %vm21
    %v23 = vsel %vm19, 0.6, 0.013333334
    %v24 = vsel %vm22, 0.0, %v23
    %v25 = vsel %vm19, -0.30649537, -0.05756651
    %v26 = vsel %vm22, 0.0, %v25
    %v27 = vmul.f32 %v24, %v14
    %v28 = vsub.f32 %v26, %v27
    %29 = vst [vmem:[%s3] sm:$0xf] %v24
    %vm30 = vcmask 1043456
    %v31 = vsel %vm30, %v28, 0.0
    %32 = vadd.xlane.f32.xlu0 %v31
    %v33 = vpop.xlane.xlu0 %32
    %v34 = vrot.slane %v33, 4
    %v35 = vadd.f32 %v33, %v34
    %v36 = vrot.slane %v35, 2
    %v37 = vadd.f32 %v35, %v36
    %v38 = vrot.slane %v37, 1
    %v39 = vadd.f32 %v37, %v38
    %s40 = vtos %v39
    %s41 = scalar_lea.smem [#allocation2], 0
    %42 = sst [smem:[%s41]] %s40
    // Predicated region
    $region10: #{label_smoothing.1} parent=1 // pred_check
      _
    $region11: #{label_smoothing.1} parent=1 // pred_check_branch
      %44 = sbr.rel (0) target = $region13
    $region12: #{label_smoothing.1} parent=1 // pred_region
      %46 = vsyncadd [#allocation3], 0
      %s48 = sshll.u32 %s2, 4
      %s49 = int_to_ptr.hbm [resolvable:$true] %s48
      %51 = dma.smem_to_hbm [#allocation2], 16, %s49, [#allocation3]
    $region13: #{label_smoothing.1} parent=1 // pred_fallthru
      _
    // Predicated region
    $region14: #{label_smoothing.1} parent=1 // pred_check
      _
    $region15: #{label_smoothing.1} parent=1 // pred_check_branch
      %53 = sbr.rel (0) target = $region17
    $region16: #{label_smoothing.1} parent=1 // pred_region
      _
    $region17: #{label_smoothing.1} parent=1 // pred_fallthru
      _
    // Predicated region
    $region18: #{label_smoothing.1} parent=1 // pred_check
      _
    $region19: #{label_smoothing.1} parent=1 // pred_check_branch
      %55 = sbr.rel (0) target = $region21
    $region20: #{label_smoothing.1} parent=1 // pred_region
      %57 = dma.done [#allocation3], 16
    $region21: #{label_smoothing.1} parent=1 // pred_fallthru
      _
    // Predicated region
    $region22: #{label_smoothing.1} parent=1 // pred_check
      _
    $region23: #{label_smoothing.1} parent=1 // pred_check_branch
      %59 = sbr.rel (0) target = $region25
    $region24: #{label_smoothing.1} parent=1 // pred_region
      _
    $region25: #{label_smoothing.1} parent=1 // pred_fallthru
      _
    %60 = sfence
    %61 = vsyncpa [#allocation3], 1

</llo_original>
